<compile_context>
chip_gen: v7x
topology: tpu7x:2x2x1
jax: 0.10.0
libtpu: 0.0.40
codegen_flags: <defaults>
</compile_context>

<pallas_src>
import functools

import jax
import jax.numpy as jnp
from jax.experimental import pallas as pl
from jax.experimental.pallas import tpu as pltpu


def _round_up(x, m):
    return ((x + m - 1) // m) * m


def qnet_kernel(states_ref, w1_ref, w2_ref, b2_ref, out_ref):
    """One batch tile of block_b states.

    states_ref : VMEM (block_b, 1) int32     per-tile state indices
    w1_ref     : VMEM (n_state_p, hidden_p)  trunk weight, b1 folded in
    w2_ref     : VMEM (hidden_p, n_pad)      folded dueling head (v/a/combine)
    b2_ref     : VMEM (1, n_pad)             folded head bias
    out_ref    : VMEM (block_b, n_pad)       lane-dense output tile
    """
    block_b = out_ref.shape[0]
    n_state_p = w1_ref.shape[0]

    # Vectorized "gather": one_hot(s) @ W1' built entirely in vector units.
    # Padded state columns never match (states < n_state), padded W1' rows
    # are zero, and each one-hot row sums to exactly 1, so folding b1 into
    # every row of W1 is exact.
    col = jax.lax.broadcasted_iota(jnp.int32, (block_b, n_state_p), 1)
    onehot = jnp.where(col == states_ref[...], 1.0, 0.0)            # (B, S)

    h = jnp.maximum(
        jnp.dot(onehot, w1_ref[...], preferred_element_type=jnp.float32), 0.0)

    out_ref[...] = (
        jnp.dot(h, w2_ref[...], preferred_element_type=jnp.float32)
        + b2_ref[...])


def fold_params(params):
    """Fold b1 into W1 and (v/a heads + dueling combine) into one padded GEMM.

      h   = relu(one_hot(s) @ (W1 + 1 b1))                    (exact)
      out = h @ [wv 1(1,n) + wa (I - 1/n)] + [bv 1(1,n) + ba (I - 1/n)]

    Done once per parameter update, not per forward call.  All operands are
    zero-padded to lane/sublane multiples so every kernel access is dense.
    """
    w1, b1 = params["w1"], params["b1"]          # (S, H), (1, H)
    wv, bv = params["wv"], params["bv"]          # (H, 1), (1, 1)
    wa, ba = params["wa"], params["ba"]          # (H, n), (1, n)
    n_state, hidden = w1.shape
    n_action = wa.shape[1]

    n_state_p = _round_up(n_state, 128)
    hidden_p = _round_up(hidden, 128)
    n_pad = _round_up(n_action, 128)             # lane-dense output slab

    ones_row = jnp.ones((1, n_action), jnp.float32)
    center = jnp.eye(n_action, dtype=jnp.float32) - 1.0 / n_action   # I - 1/n
    w_eff = wv @ ones_row + wa @ center                              # (H, n)
    b_eff = bv @ ones_row + ba @ center                              # (1, n)

    w1f = jnp.zeros((n_state_p, hidden_p), jnp.float32)
    w1f = w1f.at[:n_state, :hidden].set(w1 + b1)       # b1 folded into rows
    w2 = jnp.zeros((hidden_p, n_pad), jnp.float32).at[:hidden, :n_action].set(w_eff)
    b2 = jnp.zeros((1, n_pad), jnp.float32).at[:, :n_action].set(b_eff)
    return w1f, w2, b2, n_action


@functools.partial(jax.jit, static_argnames=("n_action", "block_b"))
def qnet_forward(states, w1f, w2, b2, *, n_action, block_b=128):
    """states: (B,) int state indices.  Returns (B, n_action) float32 Q-values."""
    assert block_b % 8 == 0
    n_state_p, hidden_p = w1f.shape
    n_pad = w2.shape[1]

    b = states.shape[0]
    b_pad = _round_up(b, block_b)
    # Pad the batch with state 0 (valid index); padded rows are sliced off.
    states2d = jnp.zeros((b_pad, 1), jnp.int32).at[:b, 0].set(
        states.astype(jnp.int32))

    grid_spec = pltpu.PrefetchScalarGridSpec(
        num_scalar_prefetch=0,
        grid=(b_pad // block_b,),
        in_specs=[
            pl.BlockSpec((block_b, 1), lambda i: (i, 0)),            # states
            pl.BlockSpec((n_state_p, hidden_p), lambda i: (0, 0)),   # W1' resident
            pl.BlockSpec((hidden_p, n_pad), lambda i: (0, 0)),       # folded head
            pl.BlockSpec((1, n_pad), lambda i: (0, 0)),              # folded bias
        ],
        out_specs=pl.BlockSpec((block_b, n_pad), lambda i: (i, 0)),
    )

    out_padded = pl.pallas_call(
        qnet_kernel,
        out_shape=jax.ShapeDtypeStruct((b_pad, n_pad), jnp.float32),
        grid_spec=grid_spec,
        compiler_params=pltpu.CompilerParams(
            dimension_semantics=("parallel",)),       # megacore over batch
    )(states2d, w1f, w2, b2)

    # Static slices: drop batch padding and the zero lane padding.
    return out_padded[:b, :n_action]


def init_params(key, n_state, n_action, hidden):
    """nn.Linear-style init (uniform +-1/sqrt(fan_in)); weights stored (in, out)."""
    ks = jax.random.split(key, 6)

    def lin(kw, kb, fan_in, fan_out):
        bound = 1.0 / jnp.sqrt(jnp.float32(fan_in))
        w = jax.random.uniform(kw, (fan_in, fan_out), jnp.float32, -bound, bound)
        b = jax.random.uniform(kb, (1, fan_out), jnp.float32, -bound, bound)
        return w, b

    w1, b1 = lin(ks[0], ks[1], n_state, hidden)
    wv, bv = lin(ks[2], ks[3], hidden, 1)
    wa, ba = lin(ks[4], ks[5], hidden, n_action)
    return dict(w1=w1, b1=b1, wv=wv, bv=bv, wa=wa, ba=ba)


def qnet_reference(states, params):
    """Pure-JAX transcription of QNet.forward for verification."""
    xs = jax.nn.one_hot(states, params["w1"].shape[0], dtype=jnp.float32)
    h = jnp.maximum(xs @ params["w1"] + params["b1"], 0.0)
    v = h @ params["wv"] + params["bv"]
    a = h @ params["wa"] + params["ba"]
    return v + (a - jnp.mean(a, axis=1, keepdims=True))


if __name__ == "__main__":
    # Real Taxi-v3 head sizes (n_state=500, n_action=6, hidden=64).  Batch 500
    # is padded to 512 inside the wrapper -> 4 grid steps of 128 rows.
    n_state, n_action, hidden = 500, 6, 64
    batch, block_b = 500, 128

    key = jax.random.PRNGKey(0)
    k_param, k_state = jax.random.split(key)
    params = init_params(k_param, n_state, n_action, hidden)
    w1f, w2, b2, n_act = fold_params(params)        # once per parameter update
    states = jax.random.randint(k_state, (batch,), 0, n_state, dtype=jnp.int32)

    out = qnet_forward(states, w1f, w2, b2, n_action=n_act, block_b=block_b)
    out = jax.block_until_ready(out)

    ref = qnet_reference(states, params)
    assert out.shape == (batch, n_action), out.shape
    # Folding b1 / the dueling combine into the weights reassociates floats,
    # hence the slightly relaxed tolerance.
    err = float(jnp.max(jnp.abs(out - ref)))
    assert jnp.allclose(out, ref, atol=1e-3, rtol=1e-3), err
    print("KERNEL_OK")
</pallas_src>

<mosaic_0001>
module attributes {stable_mosaic.version = 11 : i64} {
  func.func @qnet_kernel(%arg0: i32, %arg1: memref<128x1xi32, #tpu.memory_space<vmem>>, %arg2: memref<512x128xf32, #tpu.memory_space<vmem>>, %arg3: memref<128x128xf32, #tpu.memory_space<vmem>>, %arg4: memref<1x128xf32, #tpu.memory_space<vmem>>, %arg5: memref<128x128xf32, #tpu.memory_space<vmem>>) attributes {dimension_semantics = [#tpu.dimension_semantics<parallel>], iteration_bounds = array<i64: 4>, scalar_prefetch = 0 : i64, scratch_operands = 0 : i64, tpu.core_type = #tpu.core_type<tc>, window_params = [{transform_indices = @transform_0, window_bounds = array<i64: 128, 1>}, {pipeline_mode = #tpu.pipeline_mode<synchronous>, transform_indices = @transform_1, window_bounds = array<i64: 512, 128>}, {pipeline_mode = #tpu.pipeline_mode<synchronous>, transform_indices = @transform_2, window_bounds = array<i64: 128, 128>}, {pipeline_mode = #tpu.pipeline_mode<synchronous>, transform_indices = @transform_3, window_bounds = array<i64: 1, 128>}, {transform_indices = @transform_4, window_bounds = array<i64: 128, 128>}]} {
    %0 = tpu.iota {dimensions = array<i32: 1>} : vector<128x512xi32>
    %c0 = arith.constant 0 : index
    %c0_0 = arith.constant 0 : index
    %1 = vector.load %arg1[%c0, %c0_0] : memref<128x1xi32, #tpu.memory_space<vmem>>, vector<128x1xi32>
    %2 = vector.broadcast %1 : vector<128x1xi32> to vector<128x512xi32>
    %3 = arith.cmpi eq, %0, %2 : vector<128x512xi32>
    %cst = arith.constant 1.000000e+00 : f32
    %cst_1 = arith.constant 0.000000e+00 : f32
    %4 = vector.broadcast %cst : f32 to vector<128x512xf32>
    %5 = vector.broadcast %cst_1 : f32 to vector<128x512xf32>
    %6 = arith.select %3, %4, %5 : vector<128x512xi1>, vector<128x512xf32>
    %c0_2 = arith.constant 0 : index
    %c0_3 = arith.constant 0 : index
    %7 = vector.load %arg2[%c0_2, %c0_3] : memref<512x128xf32, #tpu.memory_space<vmem>>, vector<512x128xf32>
    %cst_4 = arith.constant dense<0.000000e+00> : vector<128x128xf32>
    %8 = tpu.matmul %6, %7, %cst_4 {dimension_numbers = #tpu.dot_dimension_numbers<[1], [0], [0], [1], [0, 0, 1, 1], [], []>} : vector<128x512xf32>, vector<512x128xf32>, vector<128x128xf32> -> vector<128x128xf32>
    %cst_5 = arith.constant 0.000000e+00 : f32
    %9 = vector.broadcast %cst_5 : f32 to vector<128x128xf32>
    %10 = arith.maximumf %8, %9 : vector<128x128xf32>
    %c0_6 = arith.constant 0 : index
    %c0_7 = arith.constant 0 : index
    %11 = vector.load %arg3[%c0_6, %c0_7] : memref<128x128xf32, #tpu.memory_space<vmem>>, vector<128x128xf32>
    %cst_8 = arith.constant dense<0.000000e+00> : vector<128x128xf32>
    %12 = tpu.matmul %10, %11, %cst_8 {dimension_numbers = #tpu.dot_dimension_numbers<[1], [0], [0], [1], [0, 0, 1, 1], [], []>} : vector<128x128xf32>, vector<128x128xf32>, vector<128x128xf32> -> vector<128x128xf32>
    %c0_9 = arith.constant 0 : index
    %c0_10 = arith.constant 0 : index
    %13 = vector.load %arg4[%c0_9, %c0_10] : memref<1x128xf32, #tpu.memory_space<vmem>>, vector<1x128xf32>
    %14 = vector.broadcast %13 : vector<1x128xf32> to vector<128x128xf32>
    %15 = arith.addf %12, %14 : vector<128x128xf32>
    %c0_11 = arith.constant 0 : index
    %c0_12 = arith.constant 0 : index
    %16 = vector.load %arg5[%c0_11, %c0_12] : memref<128x128xf32, #tpu.memory_space<vmem>>, vector<128x128xf32>
    tpu.vector_store %arg5[%c0_11, %c0_12], %15 {strides = array<i32>} : memref<128x128xf32, #tpu.memory_space<vmem>>, vector<128x128xf32>,
    return
  }
  func.func @transform_0(%arg0: i32) -> (i32, i32) {
    %c0_i32 = arith.constant 0 : i32
    %c0_i32_0 = arith.constant 0 : i32
    return %arg0, %c0_i32 : i32, i32
  }
  func.func @transform_1(%arg0: i32) -> (i32, i32) {
    %c0_i32 = arith.constant 0 : i32
    %c0_i32_0 = arith.constant 0 : i32
    %c0_i32_1 = arith.constant 0 : i32
    return %c0_i32, %c0_i32_0 : i32, i32
  }
  func.func @transform_2(%arg0: i32) -> (i32, i32) {
    %c0_i32 = arith.constant 0 : i32
    %c0_i32_0 = arith.constant 0 : i32
    %c0_i32_1 = arith.constant 0 : i32
    return %c0_i32, %c0_i32_0 : i32, i32
  }
  func.func @transform_3(%arg0: i32) -> (i32, i32) {
    %c0_i32 = arith.constant 0 : i32
    %c0_i32_0 = arith.constant 0 : i32
    %c0_i32_1 = arith.constant 0 : i32
    return %c0_i32, %c0_i32_0 : i32, i32
  }
  func.func @transform_4(%arg0: i32) -> (i32, i32) {
    %c0_i32 = arith.constant 0 : i32
    %c0_i32_0 = arith.constant 0 : i32
    return %arg0, %c0_i32 : i32, i32
  }
}

</mosaic_0001>

<llo_original>
// kernel: qnet_forward.1
$region0: #{qnet_forward.1}
  #allocation0 [shape = 'u32[]', space=smem, size = 0x4, offset = 0x4, fixed_abs, tag = 'smem constant byte address 0x4 - core index']
  #allocation1 [shape = 'u32[144,128]{1,0:T(1,128)}', space=vmem, size = 0x12000, scoped, tag = 'internal scratch']
  %s0 = inlined_call_operand.vmem [shape: s32[512,1], index: 0, kind: input, shape index: {}]
  %s1 = inlined_call_operand.vmem [shape: f32[512,128], index: 1, kind: input, shape index: {}]
  %s2 = inlined_call_operand.vmem [shape: f32[128,128], index: 2, kind: input, shape index: {}]
  %s3 = inlined_call_operand.vmem [shape: f32[1,128], index: 3, kind: input, shape index: {}]
  %s4 = inlined_call_operand.vmem [shape: f32[512,128], index: 4, kind: output, shape index: {}]
  %s5 = sld [smem:[#allocation0]]
  $region49: #{qnet_forward.1} parent=0
    _
  %s7 = ssub.s32 1, %s5
  %s8 = scalar_select 0, %s7, %s5
  loop: start=0, step=1, limit=6
  $region2: #{qnet_forward.1} parent=0 // loop_pre_header
    _
  $region3: #{qnet_forward.1} parent=0 // loop_header
    %s10 = sphi 0, %s14
    %p11 = scmp.ge.s32.totalorder %s10, 6
    %s20 = sphi 0, %s22
    %s23 = sphi 0, %s20
    %s24 = sphi 0, %s23
    %s40 = sphi 0, %s24
    %s44 = sphi 0, %s44
    %s46 = sphi 0, %s44
    %s47 = sphi 0, %s46
    %s61 = sphi 0, %s47
    %s65 = sphi 0, %s65
    %s67 = sphi 0, %s65
    %s68 = sphi 0, %s67
    %s82 = sphi 0, %s68
    %s86 = sphi 0, %s86
    %s88 = sphi 0, %s86
    %s89 = sphi 0, %s88
    %s103 = sphi 0, %s89
    %s109 = sphi 0, %s111
    %s112 = sphi 0, %s109
    %s113 = sphi 0, %s112
    %s129 = sphi 0, %s113
  $region4: #{qnet_forward.1} parent=0 // loop_header_branch
    %13 = sbr.rel (%p11) target = $region8
  $region5: #{qnet_forward.1} parent=0 // loop_body
    %s15 = ssub.s32 %s10, 1
    %s16 = ssub.s32 %s10, 2
    %s17 = sadd.s32 %s10, 1
    %s18 = ssub.s32 %s10, %s17
    %p19 = scmp.eq.s32.totalorder %s18, 0
    %s21 = sadd.s32 %s20, 1
    %s22 = scalar_select %p19, %s20, %s21
    %p25 = pneg %p19
    %p26 = scmp.eq.s32.totalorder %s10, 3
    %p27 = por %p25, %p26
    %p28 = scmp.ne.s32.totalorder %s20, %s23
    %p29 = scmp.eq.s32.totalorder %s10, 0
    %p30 = por %p28, %p29
    %p31 = scmp.ne.s32.totalorder %s20, %s23
    %p32 = scmp.eq.s32.totalorder %s15, 3
    %p33 = por %p31, %p32
    %p34 = scmp.ne.s32.totalorder %s23, %s24
    %p35 = scmp.eq.s32.totalorder %s15, 0
    %p36 = por %p34, %p35
    %p37 = scmp.ne.s32.totalorder %s23, %s24
    %p38 = scmp.eq.s32.totalorder %s16, 3
    %p39 = por %p37, %p38
    %p41 = scmp.ne.s32.totalorder %s24, %s40
    %p42 = scmp.eq.s32.totalorder %s16, 0
    %p43 = por %p41, %p42
    %s45 = sadd.s32 %s44, 1
    %p48 = scmp.eq.s32.totalorder %s10, 3
    %p49 = scmp.ne.s32.totalorder %s44, %s46
    %p50 = scmp.eq.s32.totalorder %s10, 0
    %p51 = por %p49, %p50
    %p52 = scmp.ne.s32.totalorder %s44, %s46
    %p53 = scmp.eq.s32.totalorder %s15, 3
    %p54 = por %p52, %p53
    %p55 = scmp.ne.s32.totalorder %s46, %s47
    %p56 = scmp.eq.s32.totalorder %s15, 0
    %p57 = por %p55, %p56
    %p58 = scmp.ne.s32.totalorder %s46, %s47
    %p59 = scmp.eq.s32.totalorder %s16, 3
    %p60 = por %p58, %p59
    %p62 = scmp.ne.s32.totalorder %s47, %s61
    %p63 = scmp.eq.s32.totalorder %s16, 0
    %p64 = por %p62, %p63
    %s66 = sadd.s32 %s65, 1
    %p69 = scmp.eq.s32.totalorder %s10, 3
    %p70 = scmp.ne.s32.totalorder %s65, %s67
    %p71 = scmp.eq.s32.totalorder %s10, 0
    %p72 = por %p70, %p71
    %p73 = scmp.ne.s32.totalorder %s65, %s67
    %p74 = scmp.eq.s32.totalorder %s15, 3
    %p75 = por %p73, %p74
    %p76 = scmp.ne.s32.totalorder %s67, %s68
    %p77 = scmp.eq.s32.totalorder %s15, 0
    %p78 = por %p76, %p77
    %p79 = scmp.ne.s32.totalorder %s67, %s68
    %p80 = scmp.eq.s32.totalorder %s16, 3
    %p81 = por %p79, %p80
    %p83 = scmp.ne.s32.totalorder %s68, %s82
    %p84 = scmp.eq.s32.totalorder %s16, 0
    %p85 = por %p83, %p84
    %s87 = sadd.s32 %s86, 1
    %p90 = scmp.eq.s32.totalorder %s10, 3
    %p91 = scmp.ne.s32.totalorder %s86, %s88
    %p92 = scmp.eq.s32.totalorder %s10, 0
    %p93 = por %p91, %p92
    %p94 = scmp.ne.s32.totalorder %s86, %s88
    %p95 = scmp.eq.s32.totalorder %s15, 3
    %p96 = por %p94, %p95
    %p97 = scmp.ne.s32.totalorder %s88, %s89
    %p98 = scmp.eq.s32.totalorder %s15, 0
    %p99 = por %p97, %p98
    %p100 = scmp.ne.s32.totalorder %s88, %s89
    %p101 = scmp.eq.s32.totalorder %s16, 3
    %p102 = por %p100, %p101
    %p104 = scmp.ne.s32.totalorder %s89, %s103
    %p105 = scmp.eq.s32.totalorder %s16, 0
    %p106 = por %p104, %p105
    %s107 = ssub.s32 %s10, %s17
    %p108 = scmp.eq.s32.totalorder %s107, 0
    %s110 = sadd.s32 %s109, 1
    %s111 = scalar_select %p108, %s109, %s110
    %p114 = pneg %p108
    %p115 = scmp.eq.s32.totalorder %s10, 3
    %p116 = por %p114, %p115
    %p117 = scmp.ne.s32.totalorder %s109, %s112
    %p118 = scmp.eq.s32.totalorder %s10, 0
    %p119 = por %p117, %p118
    %p120 = scmp.ne.s32.totalorder %s109, %s112
    %p121 = scmp.eq.s32.totalorder %s15, 3
    %p122 = por %p120, %p121
    %p123 = scmp.ne.s32.totalorder %s112, %s113
    %p124 = scmp.eq.s32.totalorder %s15, 0
    %p125 = por %p123, %p124
    %p126 = scmp.ne.s32.totalorder %s112, %s113
    %p127 = scmp.eq.s32.totalorder %s16, 3
    %p128 = por %p126, %p127
    %p130 = scmp.ne.s32.totalorder %s113, %s129
    %p131 = scmp.eq.s32.totalorder %s16, 0
    %p132 = por %p130, %p131
    %p133 = scmp.le.s32.totalorder 1, %s10
    %p134 = scmp.lt.s32.totalorder %s10, 5
    %p135 = pnand %p133, %p134
    %p136 = pneg %p135
    // Predicated region
    $region9: #{qnet_forward.1} parent=5 // pred_check
      _
    $region10: #{qnet_forward.1} parent=5 // pred_check_branch
      %138 = sbr.rel (%p135) target = $region12
    $region11: #{qnet_forward.1} parent=5 // pred_region
      %s139 = ssub.s32 %s10, 1
      // Predicated region
      $region13: #{qnet_forward.1} parent=11 // pred_check
        %p140 = pneg %p57
      $region14: #{qnet_forward.1} parent=11 // pred_check_branch
        %142 = sbr.rel (%p140) target = $region16
      $region15: #{qnet_forward.1} parent=11 // pred_region
        _
      $region16: #{qnet_forward.1} parent=11 // pred_fallthru
        _
      // Predicated region
      $region17: #{qnet_forward.1} parent=11 // pred_check
        %p143 = pneg %p78
      $region18: #{qnet_forward.1} parent=11 // pred_check_branch
        %145 = sbr.rel (%p143) target = $region20
      $region19: #{qnet_forward.1} parent=11 // pred_region
        _
      $region20: #{qnet_forward.1} parent=11 // pred_fallthru
        _
      // Predicated region
      $region21: #{qnet_forward.1} parent=11 // pred_check
        %p146 = pneg %p99
      $region22: #{qnet_forward.1} parent=11 // pred_check_branch
        %148 = sbr.rel (%p146) target = $region24
      $region23: #{qnet_forward.1} parent=11 // pred_region
        _
      $region24: #{qnet_forward.1} parent=11 // pred_fallthru
        _
    $region12: #{qnet_forward.1} parent=5 // pred_fallthru
      _
    %p149 = scmp.lt.s32.totalorder %s10, 4
    // Predicated region
    $region25: #{qnet_forward.1} parent=5 // pred_check
      %p150 = pneg %p149
    $region26: #{qnet_forward.1} parent=5 // pred_check_branch
      %152 = sbr.rel (%p150) target = $region28
    $region27: #{qnet_forward.1} parent=5 // pred_region
      // Predicated region
      $region29: #{qnet_forward.1} parent=27 // pred_check
        %p153 = pneg %p30
      $region30: #{qnet_forward.1} parent=27 // pred_check_branch
        %155 = sbr.rel (%p153) target = $region32
      $region31: #{qnet_forward.1} parent=27 // pred_region
        %s156 = smul.u32 16, %s10
        %p157 = scmp.lt.s32.totalorder %s156, 63
        %s158 = scalar_select %p157, %s156, 63
        %s159 = smul.addr %s158, 8
        %s160 = scalar_lea.vmem %s0, %s159
        %s161 = smul.u32 16, %s10
      $region32: #{qnet_forward.1} parent=27 // pred_fallthru
        _
    $region28: #{qnet_forward.1} parent=5 // pred_fallthru
      _
    %p162 = scmp.le.s32.totalorder 1, %s10
    %p163 = scmp.lt.s32.totalorder %s10, 5
    %p164 = pnand %p162, %p163
    %p165 = pneg %p164
    // Predicated region
    $region33: #{qnet_forward.1} parent=5 // pred_check
      _
    $region34: #{qnet_forward.1} parent=5 // pred_check_branch
      %167 = sbr.rel (%p164) target = $region36
    $region35: #{qnet_forward.1} parent=5 // pred_region
      %s168 = ssub.s32 %s10, 1
      %s169 = smul.u32 16, %s15
      %p170 = scmp.lt.s32.totalorder %s169, 63
      %s171 = scalar_select %p170, %s169, 63
      %s172 = smul.addr %s171, 8
      %s173 = scalar_lea.vmem %s0, %s172
      %p174 = pneg %p36
      %p175 = pneg %p33
      %p176 = pneg %p57
      %p177 = pneg %p54
      %p178 = pneg %p78
      %p179 = pneg %p75
      %p180 = pneg %p99
      %p181 = pneg %p96
      %p182 = pneg %p125
      %p183 = pneg %p122
      %s184 = smul.u32 16, %s15
      %p185 = scmp.lt.s32.totalorder %s184, 63
      %s186 = scalar_select %p185, %s184, 63
      %s187 = smul.addr %s186, 8
      %s188 = scalar_lea.vmem %s4, %s187
      %s189 = smul.u32 16, %s15
      %p190 = scmp.lt.s32.totalorder %s189, 63
      %s191 = scalar_select %p190, %s189, 63
      %s192 = smul.addr %s191, 8
      %s193 = scalar_lea.vmem %s0, %s192
      %s194 = smul.u32 16, %s15
      %s195 = smul.u32 16, %s15
      %p196 = scmp.lt.s32.totalorder %s195, 63
      %s197 = scalar_select %p196, %s195, 63
      %s198 = smul.addr %s197, 8
      %s199 = scalar_lea.vmem %s4, %s198
      %s200 = smul.u32 16, %s15
      %v201 = vlaneseq
      %v202 = vand.u32 %v201, 127
      %v203 = vadd.s32 %v202, 128
      %v204 = vadd.s32 %v202, 256
      %v205 = vadd.s32 %v202, 384
      %v206 = vld [vmem:[%s193] sm:$0xff]
      %v207 = vld [vmem:[%s193 + $0x8] sm:$0xff]
      %v208 = vld [vmem:[%s193 + $0x10] sm:$0xff]
      %v209 = vld [vmem:[%s193 + $0x18] sm:$0xff]
      %v210 = vld [vmem:[%s193 + $0x20] sm:$0xff]
      %v211 = vld [vmem:[%s193 + $0x28] sm:$0xff]
      %v212 = vld [vmem:[%s193 + $0x30] sm:$0xff]
      %v213 = vld [vmem:[%s193 + $0x38] sm:$0xff]
      %v214 = vld [vmem:[%s193 + $0x40] sm:$0xff]
      %v215 = vld [vmem:[%s193 + $0x48] sm:$0xff]
      %v216 = vld [vmem:[%s193 + $0x50] sm:$0xff]
      %v217 = vld [vmem:[%s193 + $0x58] sm:$0xff]
      %v218 = vld [vmem:[%s193 + $0x60] sm:$0xff]
      %v219 = vld [vmem:[%s193 + $0x68] sm:$0xff]
      %v220 = vld [vmem:[%s193 + $0x70] sm:$0xff]
      %v221 = vld [vmem:[%s193 + $0x78] sm:$0xff]
      %222 = vset.pattern.permute.xlu0 0
      %223 = vperm.xlu0 %222, %v206
      %v224 = vpop.permute.xlu0 %223
      %225 = vset.pattern.permute.xlu0 0
      %226 = vperm.xlu0 %225, %v207
      %v227 = vpop.permute.xlu0 %226
      %228 = vset.pattern.permute.xlu0 0
      %229 = vperm.xlu0 %228, %v208
      %v230 = vpop.permute.xlu0 %229
      %231 = vset.pattern.permute.xlu0 0
      %232 = vperm.xlu0 %231, %v209
      %v233 = vpop.permute.xlu0 %232
      %234 = vset.pattern.permute.xlu0 0
      %235 = vperm.xlu0 %234, %v210
      %v236 = vpop.permute.xlu0 %235
      %237 = vset.pattern.permute.xlu0 0
      %238 = vperm.xlu0 %237, %v211
      %v239 = vpop.permute.xlu0 %238
      %240 = vset.pattern.permute.xlu0 0
      %241 = vperm.xlu0 %240, %v212
      %v242 = vpop.permute.xlu0 %241
      %243 = vset.pattern.permute.xlu0 0
      %244 = vperm.xlu0 %243, %v213
      %v245 = vpop.permute.xlu0 %244
      %246 = vset.pattern.permute.xlu0 0
      %247 = vperm.xlu0 %246, %v214
      %v248 = vpop.permute.xlu0 %247
      %249 = vset.pattern.permute.xlu0 0
      %250 = vperm.xlu0 %249, %v215
      %v251 = vpop.permute.xlu0 %250
      %252 = vset.pattern.permute.xlu0 0
      %253 = vperm.xlu0 %252, %v216
      %v254 = vpop.permute.xlu0 %253
      %255 = vset.pattern.permute.xlu0 0
      %256 = vperm.xlu0 %255, %v217
      %v257 = vpop.permute.xlu0 %256
      %258 = vset.pattern.permute.xlu0 0
      %259 = vperm.xlu0 %258, %v218
      %v260 = vpop.permute.xlu0 %259
      %261 = vset.pattern.permute.xlu0 0
      %262 = vperm.xlu0 %261, %v219
      %v263 = vpop.permute.xlu0 %262
      %264 = vset.pattern.permute.xlu0 0
      %265 = vperm.xlu0 %264, %v220
      %v266 = vpop.permute.xlu0 %265
      %267 = vset.pattern.permute.xlu0 0
      %268 = vperm.xlu0 %267, %v221
      %v269 = vpop.permute.xlu0 %268
      %vm270 = vcmp.eq.s32.totalorder %v202, %v224
      %vm271 = vcmp.eq.s32.totalorder %v203, %v224
      %vm272 = vcmp.eq.s32.totalorder %v204, %v224
      %vm273 = vcmp.eq.s32.totalorder %v205, %v224
      %vm274 = vcmp.eq.s32.totalorder %v202, %v227
      %vm275 = vcmp.eq.s32.totalorder %v203, %v227
      %vm276 = vcmp.eq.s32.totalorder %v204, %v227
      %vm277 = vcmp.eq.s32.totalorder %v205, %v227
      %vm278 = vcmp.eq.s32.totalorder %v202, %v230
      %vm279 = vcmp.eq.s32.totalorder %v203, %v230
      %vm280 = vcmp.eq.s32.totalorder %v204, %v230
      %vm281 = vcmp.eq.s32.totalorder %v205, %v230
      %vm282 = vcmp.eq.s32.totalorder %v202, %v233
      %vm283 = vcmp.eq.s32.totalorder %v203, %v233
      %vm284 = vcmp.eq.s32.totalorder %v204, %v233
      %vm285 = vcmp.eq.s32.totalorder %v205, %v233
      %vm286 = vcmp.eq.s32.totalorder %v202, %v236
      %vm287 = vcmp.eq.s32.totalorder %v203, %v236
      %vm288 = vcmp.eq.s32.totalorder %v204, %v236
      %vm289 = vcmp.eq.s32.totalorder %v205, %v236
      %vm290 = vcmp.eq.s32.totalorder %v202, %v239
      %vm291 = vcmp.eq.s32.totalorder %v203, %v239
      %vm292 = vcmp.eq.s32.totalorder %v204, %v239
      %vm293 = vcmp.eq.s32.totalorder %v205, %v239
      %vm294 = vcmp.eq.s32.totalorder %v202, %v242
      %vm295 = vcmp.eq.s32.totalorder %v203, %v242
      %vm296 = vcmp.eq.s32.totalorder %v204, %v242
      %vm297 = vcmp.eq.s32.totalorder %v205, %v242
      %vm298 = vcmp.eq.s32.totalorder %v202, %v245
      %vm299 = vcmp.eq.s32.totalorder %v203, %v245
      %vm300 = vcmp.eq.s32.totalorder %v204, %v245
      %vm301 = vcmp.eq.s32.totalorder %v205, %v245
      %vm302 = vcmp.eq.s32.totalorder %v202, %v248
      %vm303 = vcmp.eq.s32.totalorder %v203, %v248
      %vm304 = vcmp.eq.s32.totalorder %v204, %v248
      %vm305 = vcmp.eq.s32.totalorder %v205, %v248
      %vm306 = vcmp.eq.s32.totalorder %v202, %v251
      %vm307 = vcmp.eq.s32.totalorder %v203, %v251
      %vm308 = vcmp.eq.s32.totalorder %v204, %v251
      %vm309 = vcmp.eq.s32.totalorder %v205, %v251
      %vm310 = vcmp.eq.s32.totalorder %v202, %v254
      %vm311 = vcmp.eq.s32.totalorder %v203, %v254
      %vm312 = vcmp.eq.s32.totalorder %v204, %v254
      %vm313 = vcmp.eq.s32.totalorder %v205, %v254
      %vm314 = vcmp.eq.s32.totalorder %v202, %v257
      %vm315 = vcmp.eq.s32.totalorder %v203, %v257
      %vm316 = vcmp.eq.s32.totalorder %v204, %v257
      %vm317 = vcmp.eq.s32.totalorder %v205, %v257
      %vm318 = vcmp.eq.s32.totalorder %v202, %v260
      %vm319 = vcmp.eq.s32.totalorder %v203, %v260
      %vm320 = vcmp.eq.s32.totalorder %v204, %v260
      %vm321 = vcmp.eq.s32.totalorder %v205, %v260
      %vm322 = vcmp.eq.s32.totalorder %v202, %v263
      %vm323 = vcmp.eq.s32.totalorder %v203, %v263
      %vm324 = vcmp.eq.s32.totalorder %v204, %v263
      %vm325 = vcmp.eq.s32.totalorder %v205, %v263
      %vm326 = vcmp.eq.s32.totalorder %v202, %v266
      %vm327 = vcmp.eq.s32.totalorder %v203, %v266
      %vm328 = vcmp.eq.s32.totalorder %v204, %v266
      %vm329 = vcmp.eq.s32.totalorder %v205, %v266
      %vm330 = vcmp.eq.s32.totalorder %v202, %v269
      %vm331 = vcmp.eq.s32.totalorder %v203, %v269
      %vm332 = vcmp.eq.s32.totalorder %v204, %v269
      %vm333 = vcmp.eq.s32.totalorder %v205, %v269
      %v334 = vsel %vm270, 1.0, 0.0
      %v335 = vsel %vm271, 1.0, 0.0
      %v336 = vsel %vm272, 1.0, 0.0
      %v337 = vsel %vm273, 1.0, 0.0
      %v338 = vsel %vm274, 1.0, 0.0
      %v339 = vsel %vm275, 1.0, 0.0
      %v340 = vsel %vm276, 1.0, 0.0
      %v341 = vsel %vm277, 1.0, 0.0
      %v342 = vsel %vm278, 1.0, 0.0
      %v343 = vsel %vm279, 1.0, 0.0
      %v344 = vsel %vm280, 1.0, 0.0
      %v345 = vsel %vm281, 1.0, 0.0
      %v346 = vsel %vm282, 1.0, 0.0
      %v347 = vsel %vm283, 1.0, 0.0
      %v348 = vsel %vm284, 1.0, 0.0
      %v349 = vsel %vm285, 1.0, 0.0
      %v350 = vsel %vm286, 1.0, 0.0
      %v351 = vsel %vm287, 1.0, 0.0
      %v352 = vsel %vm288, 1.0, 0.0
      %v353 = vsel %vm289, 1.0, 0.0
      %v354 = vsel %vm290, 1.0, 0.0
      %v355 = vsel %vm291, 1.0, 0.0
      %v356 = vsel %vm292, 1.0, 0.0
      %v357 = vsel %vm293, 1.0, 0.0
      %v358 = vsel %vm294, 1.0, 0.0
      %v359 = vsel %vm295, 1.0, 0.0
      %v360 = vsel %vm296, 1.0, 0.0
      %v361 = vsel %vm297, 1.0, 0.0
      %v362 = vsel %vm298, 1.0, 0.0
      %v363 = vsel %vm299, 1.0, 0.0
      %v364 = vsel %vm300, 1.0, 0.0
      %v365 = vsel %vm301, 1.0, 0.0
      %v366 = vsel %vm302, 1.0, 0.0
      %v367 = vsel %vm303, 1.0, 0.0
      %v368 = vsel %vm304, 1.0, 0.0
      %v369 = vsel %vm305, 1.0, 0.0
      %v370 = vsel %vm306, 1.0, 0.0
      %v371 = vsel %vm307, 1.0, 0.0
      %v372 = vsel %vm308, 1.0, 0.0
      %v373 = vsel %vm309, 1.0, 0.0
      %v374 = vsel %vm310, 1.0, 0.0
      %v375 = vsel %vm311, 1.0, 0.0
      %v376 = vsel %vm312, 1.0, 0.0
      %v377 = vsel %vm313, 1.0, 0.0
      %v378 = vsel %vm314, 1.0, 0.0
      %v379 = vsel %vm315, 1.0, 0.0
      %v380 = vsel %vm316, 1.0, 0.0
      %v381 = vsel %vm317, 1.0, 0.0
      %v382 = vsel %vm318, 1.0, 0.0
      %v383 = vsel %vm319, 1.0, 0.0
      %v384 = vsel %vm320, 1.0, 0.0
      %v385 = vsel %vm321, 1.0, 0.0
      %v386 = vsel %vm322, 1.0, 0.0
      %v387 = vsel %vm323, 1.0, 0.0
      %v388 = vsel %vm324, 1.0, 0.0
      %v389 = vsel %vm325, 1.0, 0.0
      %v390 = vsel %vm326, 1.0, 0.0
      %v391 = vsel %vm327, 1.0, 0.0
      %v392 = vsel %vm328, 1.0, 0.0
      %v393 = vsel %vm329, 1.0, 0.0
      %v394 = vsel %vm330, 1.0, 0.0
      %v395 = vsel %vm331, 1.0, 0.0
      %v396 = vsel %vm332, 1.0, 0.0
      %v397 = vsel %vm333, 1.0, 0.0
      %v398 = vld [vmem:[%s1] sm:$0xff]
      %v399 = vld [vmem:[%s1 + $0x8] sm:$0xff]
      %v400 = vld [vmem:[%s1 + $0x10] sm:$0xff]
      %v401 = vld [vmem:[%s1 + $0x18] sm:$0xff]
      %v402 = vld [vmem:[%s1 + $0x20] sm:$0xff]
      %v403 = vld [vmem:[%s1 + $0x28] sm:$0xff]
      %v404 = vld [vmem:[%s1 + $0x30] sm:$0xff]
      %v405 = vld [vmem:[%s1 + $0x38] sm:$0xff]
      %v406 = vld [vmem:[%s1 + $0x40] sm:$0xff]
      %v407 = vld [vmem:[%s1 + $0x48] sm:$0xff]
      %v408 = vld [vmem:[%s1 + $0x50] sm:$0xff]
      %v409 = vld [vmem:[%s1 + $0x58] sm:$0xff]
      %v410 = vld [vmem:[%s1 + $0x60] sm:$0xff]
      %v411 = vld [vmem:[%s1 + $0x68] sm:$0xff]
      %v412 = vld [vmem:[%s1 + $0x70] sm:$0xff]
      %v413 = vld [vmem:[%s1 + $0x78] sm:$0xff]
      %v414 = vld [vmem:[%s1 + $0x80] sm:$0xff]
      %v415 = vld [vmem:[%s1 + $0x88] sm:$0xff]
      %v416 = vld [vmem:[%s1 + $0x90] sm:$0xff]
      %v417 = vld [vmem:[%s1 + $0x98] sm:$0xff]
      %v418 = vld [vmem:[%s1 + $0xa0] sm:$0xff]
      %v419 = vld [vmem:[%s1 + $0xa8] sm:$0xff]
      %v420 = vld [vmem:[%s1 + $0xb0] sm:$0xff]
      %v421 = vld [vmem:[%s1 + $0xb8] sm:$0xff]
      %v422 = vld [vmem:[%s1 + $0xc0] sm:$0xff]
      %v423 = vld [vmem:[%s1 + $0xc8] sm:$0xff]
      %v424 = vld [vmem:[%s1 + $0xd0] sm:$0xff]
      %v425 = vld [vmem:[%s1 + $0xd8] sm:$0xff]
      %v426 = vld [vmem:[%s1 + $0xe0] sm:$0xff]
      %v427 = vld [vmem:[%s1 + $0xe8] sm:$0xff]
      %v428 = vld [vmem:[%s1 + $0xf0] sm:$0xff]
      %v429 = vld [vmem:[%s1 + $0xf8] sm:$0xff]
      %v430 = vld [vmem:[%s1 + $0x100] sm:$0xff]
      %v431 = vld [vmem:[%s1 + $0x108] sm:$0xff]
      %v432 = vld [vmem:[%s1 + $0x110] sm:$0xff]
      %v433 = vld [vmem:[%s1 + $0x118] sm:$0xff]
      %v434 = vld [vmem:[%s1 + $0x120] sm:$0xff]
      %v435 = vld [vmem:[%s1 + $0x128] sm:$0xff]
      %v436 = vld [vmem:[%s1 + $0x130] sm:$0xff]
      %v437 = vld [vmem:[%s1 + $0x138] sm:$0xff]
      %v438 = vld [vmem:[%s1 + $0x140] sm:$0xff]
      %v439 = vld [vmem:[%s1 + $0x148] sm:$0xff]
      %v440 = vld [vmem:[%s1 + $0x150] sm:$0xff]
      %v441 = vld [vmem:[%s1 + $0x158] sm:$0xff]
      %v442 = vld [vmem:[%s1 + $0x160] sm:$0xff]
      %v443 = vld [vmem:[%s1 + $0x168] sm:$0xff]
      %v444 = vld [vmem:[%s1 + $0x170] sm:$0xff]
      %v445 = vld [vmem:[%s1 + $0x178] sm:$0xff]
      %v446 = vld [vmem:[%s1 + $0x180] sm:$0xff]
      %v447 = vld [vmem:[%s1 + $0x188] sm:$0xff]
      %v448 = vld [vmem:[%s1 + $0x190] sm:$0xff]
      %v449 = vld [vmem:[%s1 + $0x198] sm:$0xff]
      %v450 = vld [vmem:[%s1 + $0x1a0] sm:$0xff]
      %v451 = vld [vmem:[%s1 + $0x1a8] sm:$0xff]
      %v452 = vld [vmem:[%s1 + $0x1b0] sm:$0xff]
      %v453 = vld [vmem:[%s1 + $0x1b8] sm:$0xff]
      %v454 = vld [vmem:[%s1 + $0x1c0] sm:$0xff]
      %v455 = vld [vmem:[%s1 + $0x1c8] sm:$0xff]
      %v456 = vld [vmem:[%s1 + $0x1d0] sm:$0xff]
      %v457 = vld [vmem:[%s1 + $0x1d8] sm:$0xff]
      %v458 = vld [vmem:[%s1 + $0x1e0] sm:$0xff]
      %v459 = vld [vmem:[%s1 + $0x1e8] sm:$0xff]
      %v460 = vld [vmem:[%s1 + $0x1f0] sm:$0xff]
      %v461 = vld [vmem:[%s1 + $0x1f8] sm:$0xff]
      %462 = vmatprep.subr.mxu0 0.0
      %463 = vmatpush1.msra.mxu0 %v398
      %464 = vmatprep.subr.mxu0 0.0
      %465 = vmatpush1.msra.mxu0 %v399
      %466 = vmatprep.subr.mxu0 0.0
      %467 = vmatpush1.msra.mxu0 %v400
      %468 = vmatprep.subr.mxu0 0.0
      %469 = vmatpush1.msra.mxu0 %v401
      %470 = vmatprep.subr.mxu0 0.0
      %471 = vmatpush1.msra.mxu0 %v402
      %472 = vmatprep.subr.mxu0 0.0
      %473 = vmatpush1.msra.mxu0 %v403
      %474 = vmatprep.subr.mxu0 0.0
      %475 = vmatpush1.msra.mxu0 %v404
      %476 = vmatprep.subr.mxu0 0.0
      %477 = vmatpush1.msra.mxu0 %v405
      %478 = vmatprep.subr.mxu0 0.0
      %479 = vmatpush1.msra.mxu0 %v406
      %480 = vmatprep.subr.mxu0 0.0
      %481 = vmatpush1.msra.mxu0 %v407
      %482 = vmatprep.subr.mxu0 0.0
      %483 = vmatpush1.msra.mxu0 %v408
      %484 = vmatprep.subr.mxu0 0.0
      %485 = vmatpush1.msra.mxu0 %v409
      %486 = vmatprep.subr.mxu0 0.0
      %487 = vmatpush1.msra.mxu0 %v410
      %488 = vmatprep.subr.mxu0 0.0
      %489 = vmatpush1.msra.mxu0 %v411
      %490 = vmatprep.subr.mxu0 0.0
      %491 = vmatpush1.msra.mxu0 %v412
      %492 = vmatprep.subr.mxu0 0.0
      %493 = vmatpush1.msra.mxu0 %v413
      %494 = vmatprep.subr.mxu0 0.0
      %495 = vmatpush1.msra.mxu0 %v414
      %496 = vmatprep.subr.mxu0 0.0
      %497 = vmatpush1.msra.mxu0 %v415
      %498 = vmatprep.subr.mxu0 0.0
      %499 = vmatpush1.msra.mxu0 %v416
      %500 = vmatprep.subr.mxu0 0.0
      %501 = vmatpush1.msra.mxu0 %v417
      %502 = vmatprep.subr.mxu0 0.0
      %503 = vmatpush1.msra.mxu0 %v418
      %504 = vmatprep.subr.mxu0 0.0
      %505 = vmatpush1.msra.mxu0 %v419
      %506 = vmatprep.subr.mxu0 0.0
      %507 = vmatpush1.msra.mxu0 %v420
      %508 = vmatprep.subr.mxu0 0.0
      %509 = vmatpush1.msra.mxu0 %v421
      %510 = vmatprep.subr.mxu0 0.0
      %511 = vmatpush1.msra.mxu0 %v422
      %512 = vmatprep.subr.mxu0 0.0
      %513 = vmatpush1.msra.mxu0 %v423
      %514 = vmatprep.subr.mxu0 0.0
      %515 = vmatpush1.msra.mxu0 %v424
      %516 = vmatprep.subr.mxu0 0.0
      %517 = vmatpush1.msra.mxu0 %v425
      %518 = vmatprep.subr.mxu0 0.0
      %519 = vmatpush1.msra.mxu0 %v426
      %520 = vmatprep.subr.mxu0 0.0
      %521 = vmatpush1.msra.mxu0 %v427
      %522 = vmatprep.subr.mxu0 0.0
      %523 = vmatpush1.msra.mxu0 %v428
      %524 = vmatprep.subr.mxu0 0.0
      %525 = vmatpush1.msra.mxu0 %v429
      %526 = vmatprep.mubr.f32.mxu0 %v335
      %527 = vmatmul.mubr.f32.gmra.mrb[0].mxu0 %v334
      %v528 = vpop.f32.mrb[0].mxu0
      %v529 = vadd.f32 0.0, %v528
      %v530 = vpop.f32.mrb[0].mxu0
      %531 = vmatprep.mubr.f32.mxu0 %v339
      %532 = vmatmul.mubr.f32.gmra.mrb[0].mxu0 %v338
      %v533 = vpop.f32.mrb[0].mxu0
      %v534 = vadd.f32 0.0, %v533
      %v535 = vpop.f32.mrb[0].mxu0
      %536 = vmatprep.mubr.f32.mxu0 %v343
      %537 = vmatmul.mubr.f32.gmra.mrb[0].mxu0 %v342
      %v538 = vpop.f32.mrb[0].mxu0
      %v539 = vadd.f32 0.0, %v538
      %v540 = vpop.f32.mrb[0].mxu0
      %541 = vmatprep.mubr.f32.mxu0 %v347
      %542 = vmatmul.mubr.f32.gmra.mrb[0].mxu0 %v346
      %v543 = vpop.f32.mrb[0].mxu0
      %v544 = vadd.f32 0.0, %v543
      %v545 = vpop.f32.mrb[0].mxu0
      %546 = vmatprep.mubr.f32.mxu0 %v351
      %547 = vmatmul.mubr.f32.gmra.mrb[0].mxu0 %v350
      %v548 = vpop.f32.mrb[0].mxu0
      %v549 = vadd.f32 0.0, %v548
      %v550 = vpop.f32.mrb[0].mxu0
      %551 = vmatprep.mubr.f32.mxu0 %v355
      %552 = vmatmul.mubr.f32.gmra.mrb[0].mxu0 %v354
      %v553 = vpop.f32.mrb[0].mxu0
      %v554 = vadd.f32 0.0, %v553
      %v555 = vpop.f32.mrb[0].mxu0
      %556 = vmatprep.mubr.f32.mxu0 %v359
      %557 = vmatmul.mubr.f32.gmra.mrb[0].mxu0 %v358
      %v558 = vpop.f32.mrb[0].mxu0
      %v559 = vadd.f32 0.0, %v558
      %v560 = vpop.f32.mrb[0].mxu0
      %561 = vmatprep.mubr.f32.mxu0 %v363
      %562 = vmatmul.mubr.f32.gmra.mrb[0].mxu0 %v362
      %v563 = vpop.f32.mrb[0].mxu0
      %v564 = vadd.f32 0.0, %v563
      %v565 = vpop.f32.mrb[0].mxu0
      %566 = vmatprep.mubr.f32.mxu0 %v367
      %567 = vmatmul.mubr.f32.gmra.mrb[0].mxu0 %v366
      %v568 = vpop.f32.mrb[0].mxu0
      %v569 = vadd.f32 0.0, %v568
      %v570 = vpop.f32.mrb[0].mxu0
      %571 = vmatprep.mubr.f32.mxu0 %v371
      %572 = vmatmul.mubr.f32.gmra.mrb[0].mxu0 %v370
      %v573 = vpop.f32.mrb[0].mxu0
      %v574 = vadd.f32 0.0, %v573
      %v575 = vpop.f32.mrb[0].mxu0
      %576 = vmatprep.mubr.f32.mxu0 %v375
      %577 = vmatmul.mubr.f32.gmra.mrb[0].mxu0 %v374
      %v578 = vpop.f32.mrb[0].mxu0
      %v579 = vadd.f32 0.0, %v578
      %v580 = vpop.f32.mrb[0].mxu0
      %581 = vmatprep.mubr.f32.mxu0 %v379
      %582 = vmatmul.mubr.f32.gmra.mrb[0].mxu0 %v378
      %v583 = vpop.f32.mrb[0].mxu0
      %v584 = vadd.f32 0.0, %v583
      %v585 = vpop.f32.mrb[0].mxu0
      %586 = vmatprep.mubr.f32.mxu0 %v383
      %587 = vmatmul.mubr.f32.gmra.mrb[0].mxu0 %v382
      %v588 = vpop.f32.mrb[0].mxu0
      %v589 = vadd.f32 0.0, %v588
      %v590 = vpop.f32.mrb[0].mxu0
      %591 = vmatprep.mubr.f32.mxu0 %v387
      %592 = vmatmul.mubr.f32.gmra.mrb[0].mxu0 %v386
      %v593 = vpop.f32.mrb[0].mxu0
      %v594 = vadd.f32 0.0, %v593
      %v595 = vpop.f32.mrb[0].mxu0
      %596 = vmatprep.mubr.f32.mxu0 %v391
      %597 = vmatmul.mubr.f32.gmra.mrb[0].mxu0 %v390
      %v598 = vpop.f32.mrb[0].mxu0
      %v599 = vadd.f32 0.0, %v598
      %v600 = vpop.f32.mrb[0].mxu0
      %601 = vmatprep.mubr.f32.mxu0 %v395
      %602 = vmatmul.mubr.f32.gmra.mrb[0].mxu0 %v394
      %v603 = vpop.f32.mrb[0].mxu0
      %v604 = vadd.f32 0.0, %v603
      %v605 = vpop.f32.mrb[0].mxu0
      %606 = vdwg.mxu0
      %607 = vmatprep.subr.mxu0 0.0
      %608 = vmatpush1.msra.mxu0 %v430
      %609 = vmatprep.subr.mxu0 0.0
      %610 = vmatpush1.msra.mxu0 %v431
      %611 = vmatprep.subr.mxu0 0.0
      %612 = vmatpush1.msra.mxu0 %v432
      %613 = vmatprep.subr.mxu0 0.0
      %614 = vmatpush1.msra.mxu0 %v433
      %615 = vmatprep.subr.mxu0 0.0
      %616 = vmatpush1.msra.mxu0 %v434
      %617 = vmatprep.subr.mxu0 0.0
      %618 = vmatpush1.msra.mxu0 %v435
      %619 = vmatprep.subr.mxu0 0.0
      %620 = vmatpush1.msra.mxu0 %v436
      %621 = vmatprep.subr.mxu0 0.0
      %622 = vmatpush1.msra.mxu0 %v437
      %623 = vmatprep.subr.mxu0 0.0
      %624 = vmatpush1.msra.mxu0 %v438
      %625 = vmatprep.subr.mxu0 0.0
      %626 = vmatpush1.msra.mxu0 %v439
      %627 = vmatprep.subr.mxu0 0.0
      %628 = vmatpush1.msra.mxu0 %v440
      %629 = vmatprep.subr.mxu0 0.0
      %630 = vmatpush1.msra.mxu0 %v441
      %631 = vmatprep.subr.mxu0 0.0
      %632 = vmatpush1.msra.mxu0 %v442
      %633 = vmatprep.subr.mxu0 0.0
      %634 = vmatpush1.msra.mxu0 %v443
      %635 = vmatprep.subr.mxu0 0.0
      %636 = vmatpush1.msra.mxu0 %v444
      %637 = vmatprep.subr.mxu0 0.0
      %638 = vmatpush1.msra.mxu0 %v445
      %639 = vmatprep.subr.mxu0 0.0
      %640 = vmatpush1.msra.mxu0 %v446
      %641 = vmatprep.subr.mxu0 0.0
      %642 = vmatpush1.msra.mxu0 %v447
      %643 = vmatprep.subr.mxu0 0.0
      %644 = vmatpush1.msra.mxu0 %v448
      %645 = vmatprep.subr.mxu0 0.0
      %646 = vmatpush1.msra.mxu0 %v449
      %647 = vmatprep.subr.mxu0 0.0
      %648 = vmatpush1.msra.mxu0 %v450
      %649 = vmatprep.subr.mxu0 0.0
      %650 = vmatpush1.msra.mxu0 %v451
      %651 = vmatprep.subr.mxu0 0.0
      %652 = vmatpush1.msra.mxu0 %v452
      %653 = vmatprep.subr.mxu0 0.0
      %654 = vmatpush1.msra.mxu0 %v453
      %655 = vmatprep.subr.mxu0 0.0
      %656 = vmatpush1.msra.mxu0 %v454
      %657 = vmatprep.subr.mxu0 0.0
      %658 = vmatpush1.msra.mxu0 %v455
      %659 = vmatprep.subr.mxu0 0.0
      %660 = vmatpush1.msra.mxu0 %v456
      %661 = vmatprep.subr.mxu0 0.0
      %662 = vmatpush1.msra.mxu0 %v457
      %663 = vmatprep.subr.mxu0 0.0
      %664 = vmatpush1.msra.mxu0 %v458
      %665 = vmatprep.subr.mxu0 0.0
      %666 = vmatpush1.msra.mxu0 %v459
      %667 = vmatprep.subr.mxu0 0.0
      %668 = vmatpush1.msra.mxu0 %v460
      %669 = vmatprep.subr.mxu0 0.0
      %670 = vmatpush1.msra.mxu0 %v461
      %671 = vmatprep.mubr.f32.mxu0 %v337
      %672 = vmatmul.mubr.f32.gmra.mrb[0].mxu0 %v336
      %v673 = vpop.f32.mrb[0].mxu0
      %v674 = vadd.f32 %v529, %v673
      %v675 = vpop.f32.mrb[0].mxu0
      %676 = vmatprep.mubr.f32.mxu0 %v341
      %677 = vmatmul.mubr.f32.gmra.mrb[0].mxu0 %v340
      %v678 = vpop.f32.mrb[0].mxu0
      %v679 = vadd.f32 %v534, %v678
      %v680 = vpop.f32.mrb[0].mxu0
      %681 = vmatprep.mubr.f32.mxu0 %v345
      %682 = vmatmul.mubr.f32.gmra.mrb[0].mxu0 %v344
      %v683 = vpop.f32.mrb[0].mxu0
      %v684 = vadd.f32 %v539, %v683
      %v685 = vpop.f32.mrb[0].mxu0
      %686 = vmatprep.mubr.f32.mxu0 %v349
      %687 = vmatmul.mubr.f32.gmra.mrb[0].mxu0 %v348
      %v688 = vpop.f32.mrb[0].mxu0
      %v689 = vadd.f32 %v544, %v688
      %v690 = vpop.f32.mrb[0].mxu0
      %691 = vmatprep.mubr.f32.mxu0 %v353
      %692 = vmatmul.mubr.f32.gmra.mrb[0].mxu0 %v352
      %v693 = vpop.f32.mrb[0].mxu0
      %v694 = vadd.f32 %v549, %v693
      %v695 = vpop.f32.mrb[0].mxu0
      %696 = vmatprep.mubr.f32.mxu0 %v357
      %697 = vmatmul.mubr.f32.gmra.mrb[0].mxu0 %v356
      %v698 = vpop.f32.mrb[0].mxu0
      %v699 = vadd.f32 %v554, %v698
      %v700 = vpop.f32.mrb[0].mxu0
      %701 = vmatprep.mubr.f32.mxu0 %v361
      %702 = vmatmul.mubr.f32.gmra.mrb[0].mxu0 %v360
      %v703 = vpop.f32.mrb[0].mxu0
      %v704 = vadd.f32 %v559, %v703
      %v705 = vpop.f32.mrb[0].mxu0
      %706 = vmatprep.mubr.f32.mxu0 %v365
      %707 = vmatmul.mubr.f32.gmra.mrb[0].mxu0 %v364
      %v708 = vpop.f32.mrb[0].mxu0
      %v709 = vadd.f32 %v564, %v708
      %v710 = vpop.f32.mrb[0].mxu0
      %711 = vmatprep.mubr.f32.mxu0 %v369
      %712 = vmatmul.mubr.f32.gmra.mrb[0].mxu0 %v368
      %v713 = vpop.f32.mrb[0].mxu0
      %v714 = vadd.f32 %v569, %v713
      %v715 = vpop.f32.mrb[0].mxu0
      %716 = vmatprep.mubr.f32.mxu0 %v373
      %717 = vmatmul.mubr.f32.gmra.mrb[0].mxu0 %v372
      %v718 = vpop.f32.mrb[0].mxu0
      %v719 = vadd.f32 %v574, %v718
      %v720 = vpop.f32.mrb[0].mxu0
      %721 = vmatprep.mubr.f32.mxu0 %v377
      %722 = vmatmul.mubr.f32.gmra.mrb[0].mxu0 %v376
      %v723 = vpop.f32.mrb[0].mxu0
      %v724 = vadd.f32 %v579, %v723
      %v725 = vpop.f32.mrb[0].mxu0
      %726 = vmatprep.mubr.f32.mxu0 %v381
      %727 = vmatmul.mubr.f32.gmra.mrb[0].mxu0 %v380
      %v728 = vpop.f32.mrb[0].mxu0
      %v729 = vadd.f32 %v584, %v728
      %v730 = vpop.f32.mrb[0].mxu0
      %731 = vmatprep.mubr.f32.mxu0 %v385
      %732 = vmatmul.mubr.f32.gmra.mrb[0].mxu0 %v384
      %v733 = vpop.f32.mrb[0].mxu0
      %v734 = vadd.f32 %v589, %v733
      %v735 = vpop.f32.mrb[0].mxu0
      %736 = vmatprep.mubr.f32.mxu0 %v389
      %737 = vmatmul.mubr.f32.gmra.mrb[0].mxu0 %v388
      %v738 = vpop.f32.mrb[0].mxu0
      %v739 = vadd.f32 %v594, %v738
      %v740 = vpop.f32.mrb[0].mxu0
      %741 = vmatprep.mubr.f32.mxu0 %v393
      %742 = vmatmul.mubr.f32.gmra.mrb[0].mxu0 %v392
      %v743 = vpop.f32.mrb[0].mxu0
      %v744 = vadd.f32 %v599, %v743
      %v745 = vpop.f32.mrb[0].mxu0
      %746 = vmatprep.mubr.f32.mxu0 %v397
      %747 = vmatmul.mubr.f32.gmra.mrb[0].mxu0 %v396
      %v748 = vpop.f32.mrb[0].mxu0
      %v749 = vadd.f32 %v604, %v748
      %v750 = vpop.f32.mrb[0].mxu0
      %751 = vdwg.mxu0
      %v752 = vmax.f32 %v674, 0.0
      %v753 = vmax.f32 %v679, 0.0
      %v754 = vmax.f32 %v684, 0.0
      %v755 = vmax.f32 %v689, 0.0
      %v756 = vmax.f32 %v694, 0.0
      %v757 = vmax.f32 %v699, 0.0
      %v758 = vmax.f32 %v704, 0.0
      %v759 = vmax.f32 %v709, 0.0
      %v760 = vmax.f32 %v714, 0.0
      %v761 = vmax.f32 %v719, 0.0
      %v762 = vmax.f32 %v724, 0.0
      %v763 = vmax.f32 %v729, 0.0
      %v764 = vmax.f32 %v734, 0.0
      %v765 = vmax.f32 %v739, 0.0
      %v766 = vmax.f32 %v744, 0.0
      %v767 = vmax.f32 %v749, 0.0
      %v768 = vld [vmem:[%s2] sm:$0xff]
      %v769 = vld [vmem:[%s2 + $0x8] sm:$0xff]
      %v770 = vld [vmem:[%s2 + $0x10] sm:$0xff]
      %v771 = vld [vmem:[%s2 + $0x18] sm:$0xff]
      %v772 = vld [vmem:[%s2 + $0x20] sm:$0xff]
      %v773 = vld [vmem:[%s2 + $0x28] sm:$0xff]
      %v774 = vld [vmem:[%s2 + $0x30] sm:$0xff]
      %v775 = vld [vmem:[%s2 + $0x38] sm:$0xff]
      %v776 = vld [vmem:[%s2 + $0x40] sm:$0xff]
      %v777 = vld [vmem:[%s2 + $0x48] sm:$0xff]
      %v778 = vld [vmem:[%s2 + $0x50] sm:$0xff]
      %v779 = vld [vmem:[%s2 + $0x58] sm:$0xff]
      %v780 = vld [vmem:[%s2 + $0x60] sm:$0xff]
      %v781 = vld [vmem:[%s2 + $0x68] sm:$0xff]
      %v782 = vld [vmem:[%s2 + $0x70] sm:$0xff]
      %v783 = vld [vmem:[%s2 + $0x78] sm:$0xff]
      %v784 = vld [vmem:[%s3] sm:$0x1]
      %v786 = vlaneseq
      %v787 = vshrl.u32 %v786, 7
      %v788 = vsub.s32 0, %v787
      %v789 = vrot.slane %v784, %v788
      %791 = vmatprep.subr.mxu0 0.0
      %792 = vmatpush1.msra.mxu0 %v768
      %793 = vmatprep.subr.mxu0 0.0
      %794 = vmatpush1.msra.mxu0 %v769
      %795 = vmatprep.subr.mxu0 0.0
      %796 = vmatpush1.msra.mxu0 %v770
      %797 = vmatprep.subr.mxu0 0.0
      %798 = vmatpush1.msra.mxu0 %v771
      %799 = vmatprep.subr.mxu0 0.0
      %800 = vmatpush1.msra.mxu0 %v772
      %801 = vmatprep.subr.mxu0 0.0
      %802 = vmatpush1.msra.mxu0 %v773
      %803 = vmatprep.subr.mxu0 0.0
      %804 = vmatpush1.msra.mxu0 %v774
      %805 = vmatprep.subr.mxu0 0.0
      %806 = vmatpush1.msra.mxu0 %v775
      %807 = vmatprep.subr.mxu0 0.0
      %808 = vmatpush1.msra.mxu0 %v776
      %809 = vmatprep.subr.mxu0 0.0
      %810 = vmatpush1.msra.mxu0 %v777
      %811 = vmatprep.subr.mxu0 0.0
      %812 = vmatpush1.msra.mxu0 %v778
      %813 = vmatprep.subr.mxu0 0.0
      %814 = vmatpush1.msra.mxu0 %v779
      %815 = vmatprep.subr.mxu0 0.0
      %816 = vmatpush1.msra.mxu0 %v780
      %817 = vmatprep.subr.mxu0 0.0
      %818 = vmatpush1.msra.mxu0 %v781
      %819 = vmatprep.subr.mxu0 0.0
      %820 = vmatpush1.msra.mxu0 %v782
      %821 = vmatprep.subr.mxu0 0.0
      %822 = vmatpush1.msra.mxu0 %v783
      %823 = vmatprep.subr.mxu0 0.0
      %824 = vmatpush1.msra.mxu0 0.0
      %825 = vmatprep.subr.mxu0 0.0
      %826 = vmatpush1.msra.mxu0 0.0
      %827 = vmatprep.subr.mxu0 0.0
      %828 = vmatpush1.msra.mxu0 0.0
      %829 = vmatprep.subr.mxu0 0.0
      %830 = vmatpush1.msra.mxu0 0.0
      %831 = vmatprep.subr.mxu0 0.0
      %832 = vmatpush1.msra.mxu0 0.0
      %833 = vmatprep.subr.mxu0 0.0
      %834 = vmatpush1.msra.mxu0 0.0
      %835 = vmatprep.subr.mxu0 0.0
      %836 = vmatpush1.msra.mxu0 0.0
      %837 = vmatprep.subr.mxu0 0.0
      %838 = vmatpush1.msra.mxu0 0.0
      %839 = vmatprep.subr.mxu0 0.0
      %840 = vmatpush1.msra.mxu0 0.0
      %841 = vmatprep.subr.mxu0 0.0
      %842 = vmatpush1.msra.mxu0 0.0
      %843 = vmatprep.subr.mxu0 0.0
      %844 = vmatpush1.msra.mxu0 0.0
      %845 = vmatprep.subr.mxu0 0.0
      %846 = vmatpush1.msra.mxu0 0.0
      %847 = vmatprep.subr.mxu0 0.0
      %848 = vmatpush1.msra.mxu0 0.0
      %849 = vmatprep.subr.mxu0 0.0
      %850 = vmatpush1.msra.mxu0 0.0
      %851 = vmatprep.subr.mxu0 0.0
      %852 = vmatpush1.msra.mxu0 0.0
      %853 = vmatprep.subr.mxu0 0.0
      %854 = vmatpush1.msra.mxu0 0.0
      %855 = vmatprep.mubr.f32.mxu0 0.0
      %856 = vmatmul.mubr.f32.gmra.mrb[0].mxu0 %v752
      %v857 = vpop.f32.mrb[0].mxu0
      %v858 = vadd.f32 %v789, %v857
      %v859 = vpop.f32.mrb[0].mxu0
      %860 = vmatprep.mubr.f32.mxu0 0.0
      %861 = vmatmul.mubr.f32.gmra.mrb[0].mxu0 %v753
      %v862 = vpop.f32.mrb[0].mxu0
      %v863 = vadd.f32 %v789, %v862
      %v864 = vpop.f32.mrb[0].mxu0
      %865 = vmatprep.mubr.f32.mxu0 0.0
      %866 = vmatmul.mubr.f32.gmra.mrb[0].mxu0 %v754
      %v867 = vpop.f32.mrb[0].mxu0
      %v868 = vadd.f32 %v789, %v867
      %v869 = vpop.f32.mrb[0].mxu0
      %870 = vmatprep.mubr.f32.mxu0 0.0
      %871 = vmatmul.mubr.f32.gmra.mrb[0].mxu0 %v755
      %v872 = vpop.f32.mrb[0].mxu0
      %v873 = vadd.f32 %v789, %v872
      %v874 = vpop.f32.mrb[0].mxu0
      %875 = vmatprep.mubr.f32.mxu0 0.0
      %876 = vmatmul.mubr.f32.gmra.mrb[0].mxu0 %v756
      %v877 = vpop.f32.mrb[0].mxu0
      %v878 = vadd.f32 %v789, %v877
      %v879 = vpop.f32.mrb[0].mxu0
      %880 = vmatprep.mubr.f32.mxu0 0.0
      %881 = vmatmul.mubr.f32.gmra.mrb[0].mxu0 %v757
      %v882 = vpop.f32.mrb[0].mxu0
      %v883 = vadd.f32 %v789, %v882
      %v884 = vpop.f32.mrb[0].mxu0
      %885 = vmatprep.mubr.f32.mxu0 0.0
      %886 = vmatmul.mubr.f32.gmra.mrb[0].mxu0 %v758
      %v887 = vpop.f32.mrb[0].mxu0
      %v888 = vadd.f32 %v789, %v887
      %v889 = vpop.f32.mrb[0].mxu0
      %890 = vmatprep.mubr.f32.mxu0 0.0
      %891 = vmatmul.mubr.f32.gmra.mrb[0].mxu0 %v759
      %v892 = vpop.f32.mrb[0].mxu0
      %v893 = vadd.f32 %v789, %v892
      %v894 = vpop.f32.mrb[0].mxu0
      %895 = vmatprep.mubr.f32.mxu0 0.0
      %896 = vmatmul.mubr.f32.gmra.mrb[0].mxu0 %v760
      %v897 = vpop.f32.mrb[0].mxu0
      %v898 = vadd.f32 %v789, %v897
      %v899 = vpop.f32.mrb[0].mxu0
      %900 = vmatprep.mubr.f32.mxu0 0.0
      %901 = vmatmul.mubr.f32.gmra.mrb[0].mxu0 %v761
      %v902 = vpop.f32.mrb[0].mxu0
      %v903 = vadd.f32 %v789, %v902
      %v904 = vpop.f32.mrb[0].mxu0
      %905 = vmatprep.mubr.f32.mxu0 0.0
      %906 = vmatmul.mubr.f32.gmra.mrb[0].mxu0 %v762
      %v907 = vpop.f32.mrb[0].mxu0
      %v908 = vadd.f32 %v789, %v907
      %v909 = vpop.f32.mrb[0].mxu0
      %910 = vmatprep.mubr.f32.mxu0 0.0
      %911 = vmatmul.mubr.f32.gmra.mrb[0].mxu0 %v763
      %v912 = vpop.f32.mrb[0].mxu0
      %v913 = vadd.f32 %v789, %v912
      %v914 = vpop.f32.mrb[0].mxu0
      %915 = vmatprep.mubr.f32.mxu0 0.0
      %916 = vmatmul.mubr.f32.gmra.mrb[0].mxu0 %v764
      %v917 = vpop.f32.mrb[0].mxu0
      %v918 = vadd.f32 %v789, %v917
      %v919 = vpop.f32.mrb[0].mxu0
      %920 = vmatprep.mubr.f32.mxu0 0.0
      %921 = vmatmul.mubr.f32.gmra.mrb[0].mxu0 %v765
      %v922 = vpop.f32.mrb[0].mxu0
      %v923 = vadd.f32 %v789, %v922
      %v924 = vpop.f32.mrb[0].mxu0
      %925 = vmatprep.mubr.f32.mxu0 0.0
      %926 = vmatmul.mubr.f32.gmra.mrb[0].mxu0 %v766
      %v927 = vpop.f32.mrb[0].mxu0
      %v928 = vadd.f32 %v789, %v927
      %v929 = vpop.f32.mrb[0].mxu0
      %930 = vmatprep.mubr.f32.mxu0 0.0
      %931 = vmatmul.mubr.f32.gmra.mrb[0].mxu0 %v767
      %v932 = vpop.f32.mrb[0].mxu0
      %v933 = vadd.f32 %v789, %v932
      %v934 = vpop.f32.mrb[0].mxu0
      %935 = vdwg.mxu0
      %936 = vst [vmem:[%s199] sm:$0xff] %v858
      %937 = vst [vmem:[%s199 + $0x8] sm:$0xff] %v863
      %938 = vst [vmem:[%s199 + $0x10] sm:$0xff] %v868
      %939 = vst [vmem:[%s199 + $0x18] sm:$0xff] %v873
      %940 = vst [vmem:[%s199 + $0x20] sm:$0xff] %v878
      %941 = vst [vmem:[%s199 + $0x28] sm:$0xff] %v883
      %942 = vst [vmem:[%s199 + $0x30] sm:$0xff] %v888
      %943 = vst [vmem:[%s199 + $0x38] sm:$0xff] %v893
      %944 = vst [vmem:[%s199 + $0x40] sm:$0xff] %v898
      %945 = vst [vmem:[%s199 + $0x48] sm:$0xff] %v903
      %946 = vst [vmem:[%s199 + $0x50] sm:$0xff] %v908
      %947 = vst [vmem:[%s199 + $0x58] sm:$0xff] %v913
      %948 = vst [vmem:[%s199 + $0x60] sm:$0xff] %v918
      %949 = vst [vmem:[%s199 + $0x68] sm:$0xff] %v923
      %950 = vst [vmem:[%s199 + $0x70] sm:$0xff] %v928
      %951 = vst [vmem:[%s199 + $0x78] sm:$0xff] %v933
      %s952 = smul.u32 16, %s15
      %p953 = scmp.lt.s32.totalorder %s952, 63
      %s954 = scalar_select %p953, %s952, 63
      %s955 = smul.addr %s954, 8
      %s956 = scalar_lea.vmem %s4, %s955
      // Predicated region
      $region37: #{qnet_forward.1} parent=35 // pred_check
        %p957 = pneg %p122
      $region38: #{qnet_forward.1} parent=35 // pred_check_branch
        %959 = sbr.rel (%p957) target = $region40
      $region39: #{qnet_forward.1} parent=35 // pred_region
        %s960 = smul.u32 16, %s15
      $region40: #{qnet_forward.1} parent=35 // pred_fallthru
        _
    $region36: #{qnet_forward.1} parent=5 // pred_fallthru
      _
    %p961 = scmp.le.s32.totalorder 2, %s10
    // Predicated region
    $region41: #{qnet_forward.1} parent=5 // pred_check
      %p962 = pneg %p961
    $region42: #{qnet_forward.1} parent=5 // pred_check_branch
      %964 = sbr.rel (%p962) target = $region44
    $region43: #{qnet_forward.1} parent=5 // pred_region
      %s965 = ssub.s32 %s10, 2
      // Predicated region
      $region45: #{qnet_forward.1} parent=43 // pred_check
        %p966 = pneg %p128
      $region46: #{qnet_forward.1} parent=43 // pred_check_branch
        %968 = sbr.rel (%p966) target = $region48
      $region47: #{qnet_forward.1} parent=43 // pred_region
        %s969 = smul.u32 16, %s16
        %p970 = scmp.lt.s32.totalorder %s969, 63
        %s971 = scalar_select %p970, %s969, 63
        %s972 = smul.addr %s971, 8
        %s973 = scalar_lea.vmem %s4, %s972
      $region48: #{qnet_forward.1} parent=43 // pred_fallthru
        _
    $region44: #{qnet_forward.1} parent=5 // pred_fallthru
      _
  $region6: #{qnet_forward.1} parent=0 // loop_footer
    %s14 = sadd.s32 1, %s10
  $region7: #{qnet_forward.1} parent=0 // loop_footer_branch
    %9 = sbr.rel target = $region3
  $region8: #{qnet_forward.1} parent=0 // loop_exit
    _

</llo_original>
